<compile_context>
chip_gen: v7x
topology: tpu7x:2x2x1
jax: 0.10.0
libtpu: 0.0.40
codegen_flags: <defaults>
</compile_context>

<pallas_src>
import functools

import jax
import jax.numpy as jnp
from jax import lax
from jax.experimental import pallas as pl
from jax.experimental.pallas import tpu as pltpu

_BN_EPS = 1e-5
_MXU_MIN_CIN = 8        # use the MXU once the contraction dim is >= 8
_BF16_MIN_C = 256       # feed bf16 to the MXU once the conv is compute-bound
_FUSED_MAX_N = 16       # bound static unroll over batch in the fused fast path


def _physical_vmem_bytes():
    """Per-core physical VMEM; conservative v7x default if the query fails."""
    try:
        info = pltpu.get_tpu_info()
        cap = getattr(info, "vmem_capacity_bytes", None)
        if cap:
            return int(cap)
    except Exception:
        pass
    return 64 << 20


# --------------------------------------------------------------------------- #
# Pass 1: per-(batch, channel) partial sum / sum-of-squares
#   out blocks are per-batch -> the N axis can be megacore-parallel on v7x.
# --------------------------------------------------------------------------- #
def _stats_kernel(x_ref, sum_ref, sumsq_ref):
    @pl.when(pl.program_id(1) == 0)
    def _init():
        sum_ref[...] = jnp.zeros_like(sum_ref)
        sumsq_ref[...] = jnp.zeros_like(sumsq_ref)

    x = x_ref[0].astype(jnp.float32)                       # (C_in, TL)
    sum_ref[0] += jnp.sum(x, axis=1, keepdims=True)        # (C_in, 1)
    sumsq_ref[0] += jnp.sum(x * x, axis=1, keepdims=True)


# --------------------------------------------------------------------------- #
# Pass 2: normalize + ReLU (+ 1x1 conv), NCL-native per (batch, L-tile) block
# --------------------------------------------------------------------------- #
def _conv_tile(w_ref, y, c_in, use_mxu, mxu_bf16):
    """(C_out, C_in) @ (C_in, TL) with dtype/unit choice."""
    if use_mxu:
        w = w_ref[...]
        if mxu_bf16:
            # w was pre-cast to bf16 in the wrapper (halves its DMA); cast y.
            return jnp.dot(w, y.astype(jnp.bfloat16),
                           preferred_element_type=jnp.float32)
        return jnp.dot(w.astype(jnp.float32), y,
                       preferred_element_type=jnp.float32)
    # Tiny channel count: short VPU FMA loop instead of lighting up the MXU.
    w = w_ref[...].astype(jnp.float32)
    out = w[:, 0:1] * y[0:1, :]
    for c in range(1, c_in):
        out = out + w[:, c:c + 1] * y[c:c + 1, :]
    return out


def _make_apply_kernel(c_in, has_conv, use_mxu, mxu_bf16):
    if has_conv:
        def kernel(scale_ref, shift_ref, w_ref, x_ref, o_ref):
            x = x_ref[0].astype(jnp.float32)               # (C_in, TL)
            y = jnp.maximum(x * scale_ref[...] + shift_ref[...], 0.0)
            out = _conv_tile(w_ref, y, c_in, use_mxu, mxu_bf16)
            o_ref[0] = out.astype(o_ref.dtype)
    else:
        def kernel(scale_ref, shift_ref, x_ref, o_ref):
            x = x_ref[0].astype(jnp.float32)
            o_ref[0] = jnp.maximum(
                x * scale_ref[...] + shift_ref[...], 0.0
            ).astype(o_ref.dtype)
    return kernel


# --------------------------------------------------------------------------- #
# Fused single-pass path for VMEM-resident problems (stats + BN + ReLU + conv)
# --------------------------------------------------------------------------- #
def _make_fused_kernel(n, l, c_in, has_conv, use_mxu, mxu_bf16, eps):
    inv_count = 1.0 / float(n * l)

    def body(gamma_ref, beta_ref, w_ref, x_ref, o_ref):
        x = x_ref[...].astype(jnp.float32)                 # (N, C_in, L)
        s = jnp.sum(x, axis=2, keepdims=True)              # (N, C_in, 1)
        ss = jnp.sum(x * x, axis=2, keepdims=True)
        mean = jnp.sum(s, axis=0) * inv_count              # (C_in, 1)
        var = jnp.maximum(jnp.sum(ss, axis=0) * inv_count - mean * mean, 0.0)
        inv_std = lax.rsqrt(var + eps)
        scale = gamma_ref[...] * inv_std                   # (C_in, 1)
        shift = beta_ref[...] - mean * scale
        y = jnp.maximum(x * scale[None] + shift[None], 0.0)  # (N, C_in, L)
        if not has_conv:
            o_ref[...] = y.astype(o_ref.dtype)
            return
        for b in range(n):                                  # n is small (fused path)
            out_b = _conv_tile(w_ref, y[b], c_in, use_mxu, mxu_bf16)
            o_ref[b] = out_b.astype(o_ref.dtype)

    if has_conv:
        return body

    def kernel_noconv(gamma_ref, beta_ref, x_ref, o_ref):
        body(gamma_ref, beta_ref, None, x_ref, o_ref)
    return kernel_noconv


# --------------------------------------------------------------------------- #
# Tiling helpers
# --------------------------------------------------------------------------- #
def _pick_l_tile(l_pad, c_in, c_out, budget):
    """Largest 128-multiple divisor of l_pad whose double-buffered f32 working
    set (x tile + out tile) fits the generation-aware VMEM budget."""
    n128 = l_pad // 128
    for m in range(min(n128, 512), 0, -1):
        if n128 % m == 0 and 8 * (m * 128) * (c_in + c_out) <= budget:
            return m * 128
    return 128


# --------------------------------------------------------------------------- #
# Wrapper
# --------------------------------------------------------------------------- #
@functools.partial(jax.jit, static_argnames=("disable_conv", "allow_fused"))
def bottleneck_block(x, gamma, beta, w=None, *, disable_conv=False,
                     allow_fused=True):
    """x: (N, C_in, L).  w: (C_out, C_in) == torch conv1.weight[:, :, 0].

    Returns (N, C_out, L), or (N, C_in, L) when disable_conv=True.
    """
    n, c_in, l = x.shape
    c_out = c_in if disable_conv else w.shape[0]
    has_conv = not disable_conv

    phys_vmem = _physical_vmem_bytes()
    vmem_limit = int(phys_vmem * 7 // 10)          # ~45 MiB v7x, ~90 MiB v5e/v6e
    tile_budget = max(16 << 20, int(phys_vmem * 0.35))

    use_mxu = has_conv and (c_in >= _MXU_MIN_CIN)
    mxu_bf16 = use_mxu and (x.dtype == jnp.bfloat16
                            or (c_in >= _BF16_MIN_C and c_out >= _BF16_MIN_C))
    w_in = None
    if has_conv:
        w_in = w.astype(jnp.bfloat16) if mxu_bf16 else w

    # ---- fused single-pass fast path (x + out VMEM-resident) --------------- #
    fused_bytes = 4 * n * l * (3 * c_in + 2 * c_out)   # rough f32 working set
    if allow_fused and n <= _FUSED_MAX_N and fused_bytes <= int(phys_vmem * 0.3):
        gamma2 = gamma.astype(jnp.float32).reshape(c_in, 1)
        beta2 = beta.astype(jnp.float32).reshape(c_in, 1)
        kernel = _make_fused_kernel(n, l, c_in, has_conv, use_mxu, mxu_bf16,
                                    _BN_EPS)
        chan_spec = pl.BlockSpec((c_in, 1), lambda i: (0, 0))
        in_specs = [chan_spec, chan_spec]
        args = [gamma2, beta2]
        if has_conv:
            in_specs.append(pl.BlockSpec((c_out, c_in), lambda i: (0, 0)))
            args.append(w_in)
        in_specs.append(pl.BlockSpec((n, c_in, l), lambda i: (0, 0, 0)))
        args.append(x)
        return pl.pallas_call(
            kernel,
            out_shape=jax.ShapeDtypeStruct((n, c_out, l), x.dtype),
            grid=(1,),
            in_specs=in_specs,
            out_specs=pl.BlockSpec((n, c_out, l), lambda i: (0, 0, 0)),
            compiler_params=pltpu.CompilerParams(
                dimension_semantics=("arbitrary",),
                vmem_limit_bytes=vmem_limit),
        )(*args)

    # ---- tiled two-pass path ----------------------------------------------- #
    # Pad L to a multiple of 128 (zeros do not perturb sum / sum-of-squares;
    # padded output columns are sliced off at the end).
    l_pad = ((l + 127) // 128) * 128
    x_p = x if l_pad == l else jnp.pad(x, ((0, 0), (0, 0), (0, l_pad - l)))

    tl = _pick_l_tile(l_pad, c_in, c_out, tile_budget)
    grid = (n, l_pad // tl)

    x_spec = pl.BlockSpec((1, c_in, tl), lambda i, j: (i, 0, j))
    chan_spec = pl.BlockSpec((c_in, 1), lambda i, j: (0, 0))
    part_spec = pl.BlockSpec((1, c_in, 1), lambda i, j: (i, 0, 0))

    # ---- pass 1: per-batch partial sums (megacore-parallel over N) --------- #
    psum, psumsq = pl.pallas_call(
        _stats_kernel,
        out_shape=(jax.ShapeDtypeStruct((n, c_in, 1), jnp.float32),
                   jax.ShapeDtypeStruct((n, c_in, 1), jnp.float32)),
        grid=grid,
        in_specs=[x_spec],
        out_specs=(part_spec, part_spec),
        compiler_params=pltpu.CompilerParams(
            dimension_semantics=("parallel", "arbitrary"),
            vmem_limit_bytes=vmem_limit),
        cost_estimate=pl.CostEstimate(
            flops=3 * n * c_in * l_pad,
            transcendentals=0,
            bytes_accessed=4 * (n * c_in * l_pad + 2 * n * c_in)),
    )(x_p)

    # ---- fold BN into a single FMA per element ----------------------------- #
    count = jnp.float32(n * l)                                 # real (unpadded) count
    sums = jnp.sum(psum, axis=0)                               # (C_in, 1)
    sumsqs = jnp.sum(psumsq, axis=0)
    mean = sums / count
    var = jnp.maximum(sumsqs / count - mean * mean, 0.0)       # biased var (training BN)
    inv_std = lax.rsqrt(var + _BN_EPS)
    scale = gamma.astype(jnp.float32).reshape(c_in, 1) * inv_std
    shift = beta.astype(jnp.float32).reshape(c_in, 1) - mean * scale

    # ---- pass 2: normalize + ReLU (+ 1x1 conv) ------------------------------ #
    kernel = _make_apply_kernel(c_in, has_conv, use_mxu, mxu_bf16)
    out_spec = pl.BlockSpec((1, c_out, tl), lambda i, j: (i, 0, j))

    if disable_conv:
        in_specs = [chan_spec, chan_spec, x_spec]
        args = (scale, shift, x_p)
        flops = 2 * n * c_in * l_pad
        w_bytes = 0
    else:
        w_spec = pl.BlockSpec((c_out, c_in), lambda i, j: (0, 0))
        in_specs = [chan_spec, chan_spec, w_spec, x_spec]
        args = (scale, shift, w_in, x_p)
        flops = 2 * n * c_in * l_pad + 2 * n * l_pad * c_in * c_out
        w_bytes = w_in.dtype.itemsize * c_in * c_out

    out = pl.pallas_call(
        kernel,
        out_shape=jax.ShapeDtypeStruct((n, c_out, l_pad), x.dtype),
        grid=grid,
        in_specs=in_specs,
        out_specs=out_spec,
        compiler_params=pltpu.CompilerParams(
            dimension_semantics=("parallel", "parallel"),
            vmem_limit_bytes=vmem_limit),
        cost_estimate=pl.CostEstimate(
            flops=flops,
            transcendentals=0,
            bytes_accessed=(x.dtype.itemsize * (n * c_in * l_pad + n * c_out * l_pad)
                            + w_bytes + 8 * c_in)),
    )(*args)

    if l_pad != l:
        out = out[:, :, :l]
    return out


# --------------------------------------------------------------------------- #
# Pure-JAX reference (training-mode BN + ReLU + 1x1 Conv1d)
# --------------------------------------------------------------------------- #
def _reference(x, gamma, beta, w, disable_conv=False):
    mean = jnp.mean(x, axis=(0, 2), keepdims=True)
    var = jnp.mean((x - mean) ** 2, axis=(0, 2), keepdims=True)
    y = (x - mean) * (gamma.reshape(1, -1, 1) * lax.rsqrt(var + _BN_EPS)) \
        + beta.reshape(1, -1, 1)
    y = jnp.maximum(y, 0.0)
    if disable_conv:
        return y
    # out[n, o, l] = sum_c w[o, c] * y[n, c, l]
    return jnp.einsum("ncl,oc->nol", y, w)


if __name__ == "__main__":
    key = jax.random.PRNGKey(0)
    k_x, k_w, k_x2, k_w2, k_x3, k_w3 = jax.random.split(key, 6)

    # --- small demo shapes matching the module (fused fast path, VPU conv) ---
    N, C_IN, L = 2, 4, 16
    C_OUT = 8

    x = jax.random.normal(k_x, (N, C_IN, L), dtype=jnp.float32)
    gamma = jnp.ones((C_IN,), dtype=jnp.float32)    # BatchNorm1d default weight
    beta = jnp.zeros((C_IN,), dtype=jnp.float32)    # BatchNorm1d default bias
    # Conv1d(C_IN, C_OUT, kernel_size=1, bias=False) weight[:, :, 0] -> (C_OUT, C_IN)
    w = jax.random.normal(k_w, (C_OUT, C_IN), dtype=jnp.float32) * (1.0 / C_IN ** 0.5)

    out = jax.block_until_ready(bottleneck_block(x, gamma, beta, w))
    ref = _reference(x, gamma, beta, w)
    assert out.shape == (N, C_OUT, L), out.shape
    assert jnp.allclose(out, ref, atol=1e-4, rtol=1e-4), \
        float(jnp.max(jnp.abs(out - ref)))

    # disable_conv=True path (BN + ReLU only, fused)
    out2 = jax.block_until_ready(bottleneck_block(x, gamma, beta, None,
                                                  disable_conv=True))
    ref2 = _reference(x, gamma, beta, None, disable_conv=True)
    assert out2.shape == (N, C_IN, L)
    assert jnp.allclose(out2, ref2, atol=1e-4, rtol=1e-4)

    # same tiny shapes, tiled two-pass path (exercises L padding 16 -> 128)
    out3 = jax.block_until_ready(bottleneck_block(x, gamma, beta, w,
                                                  allow_fused=False))
    assert out3.shape == (N, C_OUT, L)
    assert jnp.allclose(out3, ref, atol=1e-4, rtol=1e-4), \
        float(jnp.max(jnp.abs(out3 - ref)))

    # --- tiled grid + MXU (f32) path ---
    N2, C_IN2, L2, C_OUT2 = 2, 128, 384, 128
    xb = jax.random.normal(k_x2, (N2, C_IN2, L2), dtype=jnp.float32)
    gb = jnp.ones((C_IN2,), dtype=jnp.float32)
    bb = jnp.zeros((C_IN2,), dtype=jnp.float32)
    wb = jax.random.normal(k_w2, (C_OUT2, C_IN2), dtype=jnp.float32) * (1.0 / C_IN2 ** 0.5)

    outb = jax.block_until_ready(bottleneck_block(xb, gb, bb, wb,
                                                  allow_fused=False))
    refb = _reference(xb, gb, bb, wb)
    assert outb.shape == (N2, C_OUT2, L2)
    assert jnp.allclose(outb, refb, atol=2e-3, rtol=2e-3), \
        float(jnp.max(jnp.abs(outb - refb)))

    # --- tiled grid + MXU (bf16 operands, f32 accumulation) path ---
    N3, C_IN3, L3, C_OUT3 = 2, 256, 512, 256
    xc = jax.random.normal(k_x3, (N3, C_IN3, L3), dtype=jnp.float32)
    gc = jnp.ones((C_IN3,), dtype=jnp.float32)
    bc = jnp.zeros((C_IN3,), dtype=jnp.float32)
    wc = jax.random.normal(k_w3, (C_OUT3, C_IN3), dtype=jnp.float32) * (1.0 / C_IN3 ** 0.5)

    outc = jax.block_until_ready(bottleneck_block(xc, gc, bc, wc,
                                                  allow_fused=False))
    refc = _reference(xc, gc, bc, wc)
    assert outc.shape == (N3, C_OUT3, L3)
    assert jnp.allclose(outc, refc, atol=5e-2, rtol=5e-2), \
        float(jnp.max(jnp.abs(outc - refc)))

    print("KERNEL_OK")
</pallas_src>

<mosaic_0001>
module attributes {stable_mosaic.version = 11 : i64} {
  func.func @body(%arg0: i32, %arg1: memref<4x1xf32, #tpu.memory_space<vmem>>, %arg2: memref<4x1xf32, #tpu.memory_space<vmem>>, %arg3: memref<8x4xf32, #tpu.memory_space<vmem>>, %arg4: memref<2x4x16xf32, #tpu.memory_space<vmem>>, %arg5: memref<2x8x16xf32, #tpu.memory_space<vmem>>) attributes {dimension_semantics = [#tpu.dimension_semantics<arbitrary>], iteration_bounds = array<i64: 1>, scalar_prefetch = 0 : i64, scratch_operands = 0 : i64, tpu.core_type = #tpu.core_type<tc>, window_params = [{pipeline_mode = #tpu.pipeline_mode<synchronous>, transform_indices = @transform_0, window_bounds = array<i64: 4, 1>}, {pipeline_mode = #tpu.pipeline_mode<synchronous>, transform_indices = @transform_1, window_bounds = array<i64: 4, 1>}, {pipeline_mode = #tpu.pipeline_mode<synchronous>, transform_indices = @transform_2, window_bounds = array<i64: 8, 4>}, {pipeline_mode = #tpu.pipeline_mode<synchronous>, transform_indices = @transform_3, window_bounds = array<i64: 2, 4, 16>}, {pipeline_mode = #tpu.pipeline_mode<synchronous>, transform_indices = @transform_4, window_bounds = array<i64: 2, 8, 16>}]} {
    %c0 = arith.constant 0 : index
    %c0_0 = arith.constant 0 : index
    %c0_1 = arith.constant 0 : index
    %0 = vector.load %arg4[%c0, %c0_0, %c0_1] : memref<2x4x16xf32, #tpu.memory_space<vmem>>, vector<2x4x16xf32>
    %cst = arith.constant dense<0.000000e+00> : vector<2x4xf32>
    %1 = vector.multi_reduction <add>, %0, %cst [2] : vector<2x4x16xf32> to vector<2x4xf32>
    %2 = vector.shape_cast %1 : vector<2x4xf32> to vector<2x4x1xf32>
    %3 = arith.mulf %0, %0 : vector<2x4x16xf32>
    %cst_2 = arith.constant dense<0.000000e+00> : vector<2x4xf32>
    %4 = vector.multi_reduction <add>, %3, %cst_2 [2] : vector<2x4x16xf32> to vector<2x4xf32>
    %5 = vector.shape_cast %4 : vector<2x4xf32> to vector<2x4x1xf32>
    %cst_3 = arith.constant dense<0.000000e+00> : vector<4x1xf32>
    %6 = vector.multi_reduction <add>, %2, %cst_3 [0] : vector<2x4x1xf32> to vector<4x1xf32>
    %cst_4 = arith.constant 3.125000e-02 : f32
    %7 = vector.broadcast %cst_4 : f32 to vector<4x1xf32>
    %8 = arith.mulf %6, %7 : vector<4x1xf32>
    %cst_5 = arith.constant dense<0.000000e+00> : vector<4x1xf32>
    %9 = vector.multi_reduction <add>, %5, %cst_5 [0] : vector<2x4x1xf32> to vector<4x1xf32>
    %cst_6 = arith.constant 3.125000e-02 : f32
    %10 = vector.broadcast %cst_6 : f32 to vector<4x1xf32>
    %11 = arith.mulf %9, %10 : vector<4x1xf32>
    %12 = arith.mulf %8, %8 : vector<4x1xf32>
    %13 = arith.subf %11, %12 : vector<4x1xf32>
    %cst_7 = arith.constant 0.000000e+00 : f32
    %14 = vector.broadcast %cst_7 : f32 to vector<4x1xf32>
    %15 = arith.maximumf %13, %14 : vector<4x1xf32>
    %cst_8 = arith.constant 9.99999974E-6 : f32
    %16 = vector.broadcast %cst_8 : f32 to vector<4x1xf32>
    %17 = arith.addf %15, %16 : vector<4x1xf32>
    %18 = math.rsqrt %17 : vector<4x1xf32>
    %c0_9 = arith.constant 0 : index
    %c0_10 = arith.constant 0 : index
    %19 = vector.load %arg1[%c0_9, %c0_10] : memref<4x1xf32, #tpu.memory_space<vmem>>, vector<4x1xf32>
    %20 = arith.mulf %19, %18 : vector<4x1xf32>
    %c0_11 = arith.constant 0 : index
    %c0_12 = arith.constant 0 : index
    %21 = vector.load %arg2[%c0_11, %c0_12] : memref<4x1xf32, #tpu.memory_space<vmem>>, vector<4x1xf32>
    %22 = arith.mulf %8, %20 : vector<4x1xf32>
    %23 = arith.subf %21, %22 : vector<4x1xf32>
    %24 = vector.shape_cast %20 : vector<4x1xf32> to vector<1x4x1xf32>
    %25 = vector.broadcast %24 : vector<1x4x1xf32> to vector<2x4x16xf32>
    %26 = arith.mulf %0, %25 : vector<2x4x16xf32>
    %27 = vector.shape_cast %23 : vector<4x1xf32> to vector<1x4x1xf32>
    %28 = vector.broadcast %27 : vector<1x4x1xf32> to vector<2x4x16xf32>
    %29 = arith.addf %26, %28 : vector<2x4x16xf32>
    %cst_13 = arith.constant 0.000000e+00 : f32
    %30 = vector.broadcast %cst_13 : f32 to vector<2x4x16xf32>
    %31 = arith.maximumf %29, %30 : vector<2x4x16xf32>
    %32 = vector.extract_strided_slice %31 {offsets = [0, 0, 0], sizes = [1, 4, 16], strides = [1, 1, 1]} : vector<2x4x16xf32> to vector<1x4x16xf32>
    %33 = vector.shape_cast %32 : vector<1x4x16xf32> to vector<4x16xf32>
    %c0_14 = arith.constant 0 : index
    %c0_15 = arith.constant 0 : index
    %34 = vector.load %arg3[%c0_14, %c0_15] : memref<8x4xf32, #tpu.memory_space<vmem>>, vector<8x4xf32>
    %35 = vector.extract_strided_slice %34 {offsets = [0, 0], sizes = [8, 1], strides = [1, 1]} : vector<8x4xf32> to vector<8x1xf32>
    %36 = vector.extract_strided_slice %33 {offsets = [0, 0], sizes = [1, 16], strides = [1, 1]} : vector<4x16xf32> to vector<1x16xf32>
    %37 = vector.broadcast %35 : vector<8x1xf32> to vector<8x16xf32>
    %38 = vector.broadcast %36 : vector<1x16xf32> to vector<8x16xf32>
    %39 = arith.mulf %37, %38 : vector<8x16xf32>
    %40 = vector.extract_strided_slice %34 {offsets = [0, 1], sizes = [8, 1], strides = [1, 1]} : vector<8x4xf32> to vector<8x1xf32>
    %41 = vector.extract_strided_slice %33 {offsets = [1, 0], sizes = [1, 16], strides = [1, 1]} : vector<4x16xf32> to vector<1x16xf32>
    %42 = vector.broadcast %40 : vector<8x1xf32> to vector<8x16xf32>
    %43 = vector.broadcast %41 : vector<1x16xf32> to vector<8x16xf32>
    %44 = arith.mulf %42, %43 : vector<8x16xf32>
    %45 = arith.addf %39, %44 : vector<8x16xf32>
    %46 = vector.extract_strided_slice %34 {offsets = [0, 2], sizes = [8, 1], strides = [1, 1]} : vector<8x4xf32> to vector<8x1xf32>
    %47 = vector.extract_strided_slice %33 {offsets = [2, 0], sizes = [1, 16], strides = [1, 1]} : vector<4x16xf32> to vector<1x16xf32>
    %48 = vector.broadcast %46 : vector<8x1xf32> to vector<8x16xf32>
    %49 = vector.broadcast %47 : vector<1x16xf32> to vector<8x16xf32>
    %50 = arith.mulf %48, %49 : vector<8x16xf32>
    %51 = arith.addf %45, %50 : vector<8x16xf32>
    %52 = vector.extract_strided_slice %34 {offsets = [0, 3], sizes = [8, 1], strides = [1, 1]} : vector<8x4xf32> to vector<8x1xf32>
    %53 = vector.extract_strided_slice %33 {offsets = [3, 0], sizes = [1, 16], strides = [1, 1]} : vector<4x16xf32> to vector<1x16xf32>
    %54 = vector.broadcast %52 : vector<8x1xf32> to vector<8x16xf32>
    %55 = vector.broadcast %53 : vector<1x16xf32> to vector<8x16xf32>
    %56 = arith.mulf %54, %55 : vector<8x16xf32>
    %57 = arith.addf %51, %56 : vector<8x16xf32>
    %c0_16 = arith.constant 0 : index
    %c0_17 = arith.constant 0 : index
    %c0_18 = arith.constant 0 : index
    %58 = vector.load %arg5[%c0_16, %c0_17, %c0_18] : memref<2x8x16xf32, #tpu.memory_space<vmem>>, vector<1x8x16xf32>
    %59 = vector.shape_cast %58 : vector<1x8x16xf32> to vector<8x16xf32>
    %60 = vector.shape_cast %57 : vector<8x16xf32> to vector<1x8x16xf32>
    tpu.vector_store %arg5[%c0_16, %c0_17, %c0_18], %60 {strides = array<i32>} : memref<2x8x16xf32, #tpu.memory_space<vmem>>, vector<1x8x16xf32>,
    %61 = vector.extract_strided_slice %31 {offsets = [1, 0, 0], sizes = [1, 4, 16], strides = [1, 1, 1]} : vector<2x4x16xf32> to vector<1x4x16xf32>
    %62 = vector.shape_cast %61 : vector<1x4x16xf32> to vector<4x16xf32>
    %c0_19 = arith.constant 0 : index
    %c0_20 = arith.constant 0 : index
    %63 = vector.load %arg3[%c0_19, %c0_20] : memref<8x4xf32, #tpu.memory_space<vmem>>, vector<8x4xf32>
    %64 = vector.extract_strided_slice %63 {offsets = [0, 0], sizes = [8, 1], strides = [1, 1]} : vector<8x4xf32> to vector<8x1xf32>
    %65 = vector.extract_strided_slice %62 {offsets = [0, 0], sizes = [1, 16], strides = [1, 1]} : vector<4x16xf32> to vector<1x16xf32>
    %66 = vector.broadcast %64 : vector<8x1xf32> to vector<8x16xf32>
    %67 = vector.broadcast %65 : vector<1x16xf32> to vector<8x16xf32>
    %68 = arith.mulf %66, %67 : vector<8x16xf32>
    %69 = vector.extract_strided_slice %63 {offsets = [0, 1], sizes = [8, 1], strides = [1, 1]} : vector<8x4xf32> to vector<8x1xf32>
    %70 = vector.extract_strided_slice %62 {offsets = [1, 0], sizes = [1, 16], strides = [1, 1]} : vector<4x16xf32> to vector<1x16xf32>
    %71 = vector.broadcast %69 : vector<8x1xf32> to vector<8x16xf32>
    %72 = vector.broadcast %70 : vector<1x16xf32> to vector<8x16xf32>
    %73 = arith.mulf %71, %72 : vector<8x16xf32>
    %74 = arith.addf %68, %73 : vector<8x16xf32>
    %75 = vector.extract_strided_slice %63 {offsets = [0, 2], sizes = [8, 1], strides = [1, 1]} : vector<8x4xf32> to vector<8x1xf32>
    %76 = vector.extract_strided_slice %62 {offsets = [2, 0], sizes = [1, 16], strides = [1, 1]} : vector<4x16xf32> to vector<1x16xf32>
    %77 = vector.broadcast %75 : vector<8x1xf32> to vector<8x16xf32>
    %78 = vector.broadcast %76 : vector<1x16xf32> to vector<8x16xf32>
    %79 = arith.mulf %77, %78 : vector<8x16xf32>
    %80 = arith.addf %74, %79 : vector<8x16xf32>
    %81 = vector.extract_strided_slice %63 {offsets = [0, 3], sizes = [8, 1], strides = [1, 1]} : vector<8x4xf32> to vector<8x1xf32>
    %82 = vector.extract_strided_slice %62 {offsets = [3, 0], sizes = [1, 16], strides = [1, 1]} : vector<4x16xf32> to vector<1x16xf32>
    %83 = vector.broadcast %81 : vector<8x1xf32> to vector<8x16xf32>
    %84 = vector.broadcast %82 : vector<1x16xf32> to vector<8x16xf32>
    %85 = arith.mulf %83, %84 : vector<8x16xf32>
    %86 = arith.addf %80, %85 : vector<8x16xf32>
    %c1 = arith.constant 1 : index
    %c0_21 = arith.constant 0 : index
    %c0_22 = arith.constant 0 : index
    %87 = vector.load %arg5[%c1, %c0_21, %c0_22] : memref<2x8x16xf32, #tpu.memory_space<vmem>>, vector<1x8x16xf32>
    %88 = vector.shape_cast %87 : vector<1x8x16xf32> to vector<8x16xf32>
    %89 = vector.shape_cast %86 : vector<8x16xf32> to vector<1x8x16xf32>
    tpu.vector_store %arg5[%c1, %c0_21, %c0_22], %89 {strides = array<i32>} : memref<2x8x16xf32, #tpu.memory_space<vmem>>, vector<1x8x16xf32>,
    return
  }
  func.func @transform_0(%arg0: i32) -> (i32, i32) {
    %c0_i32 = arith.constant 0 : i32
    %c0_i32_0 = arith.constant 0 : i32
    %c0_i32_1 = arith.constant 0 : i32
    return %c0_i32, %c0_i32_0 : i32, i32
  }
  func.func @transform_1(%arg0: i32) -> (i32, i32) {
    %c0_i32 = arith.constant 0 : i32
    %c0_i32_0 = arith.constant 0 : i32
    %c0_i32_1 = arith.constant 0 : i32
    return %c0_i32, %c0_i32_0 : i32, i32
  }
  func.func @transform_2(%arg0: i32) -> (i32, i32) {
    %c0_i32 = arith.constant 0 : i32
    %c0_i32_0 = arith.constant 0 : i32
    %c0_i32_1 = arith.constant 0 : i32
    return %c0_i32, %c0_i32_0 : i32, i32
  }
  func.func @transform_3(%arg0: i32) -> (i32, i32, i32) {
    %c0_i32 = arith.constant 0 : i32
    %c0_i32_0 = arith.constant 0 : i32
    %c0_i32_1 = arith.constant 0 : i32
    %c0_i32_2 = arith.constant 0 : i32
    return %c0_i32, %c0_i32_0, %c0_i32_1 : i32, i32, i32
  }
  func.func @transform_4(%arg0: i32) -> (i32, i32, i32) {
    %c0_i32 = arith.constant 0 : i32
    %c0_i32_0 = arith.constant 0 : i32
    %c0_i32_1 = arith.constant 0 : i32
    %c0_i32_2 = arith.constant 0 : i32
    return %c0_i32, %c0_i32_0, %c0_i32_1 : i32, i32, i32
  }
}

</mosaic_0001>

<llo_original>
// kernel: bottleneck_block.1
$region0: #{bottleneck_block.1}
  #allocation0 [shape = 'u32[]', space=smem, size = 0x4, offset = 0x4, fixed_abs, tag = 'smem constant byte address 0x4 - core index']
  #allocation1 [shape = 'u32[144,128]{1,0:T(1,128)}', space=vmem, size = 0x12000, scoped, tag = 'internal scratch']
  %s0 = inlined_call_operand.vmem [shape: f32[4,1], index: 0, kind: input, shape index: {}]
  %s1 = inlined_call_operand.vmem [shape: f32[4,1], index: 1, kind: input, shape index: {}]
  %s2 = inlined_call_operand.vmem [shape: f32[8,4], index: 2, kind: input, shape index: {}]
  %s3 = inlined_call_operand.vmem [shape: f32[2,4,16], index: 3, kind: input, shape index: {}]
  %s4 = inlined_call_operand.hbm [shape: f32[2,8,16], index: 4, kind: output, shape index: {}]
  %s5 = sld [smem:[#allocation0]]
  $region26: #{bottleneck_block.1} parent=0
    _
  %s7 = ssub.s32 1, %s5
  %s8 = scalar_select 0, %s7, %s5
  $region1: #{bottleneck_block.1} parent=0
    #allocation2 [shape = 'u8[8192]{0}', space=vmem, size = 0x2000, scoped, tag = 'output window, operand 0, single buffered']
    #allocation3 [shape = 's32[1]{0}', space=sflag, size = 0x4, scoped, tag = 'scoped memory for bottleneck_block.1']
    %9 = vsyncpa [#allocation3], 0
    // Predicated region
    $region2: #{bottleneck_block.1} parent=1 // pred_check
      _
    $region3: #{bottleneck_block.1} parent=1 // pred_check_branch
      %11 = sbr.rel (0) target = $region5
    $region4: #{bottleneck_block.1} parent=1 // pred_region
      _
    $region5: #{bottleneck_block.1} parent=1 // pred_fallthru
      _
    // Predicated region
    $region6: #{bottleneck_block.1} parent=1 // pred_check
      _
    $region7: #{bottleneck_block.1} parent=1 // pred_check_branch
      %13 = sbr.rel (0) target = $region9
    $region8: #{bottleneck_block.1} parent=1 // pred_region
      _
    $region9: #{bottleneck_block.1} parent=1 // pred_fallthru
      _
    // Predicated region
    $region10: #{bottleneck_block.1} parent=1 // pred_check
      _
    $region11: #{bottleneck_block.1} parent=1 // pred_check_branch
      %15 = sbr.rel (0) target = $region13
    $region12: #{bottleneck_block.1} parent=1 // pred_region
      _
    $region13: #{bottleneck_block.1} parent=1 // pred_fallthru
      _
    // Predicated region
    $region14: #{bottleneck_block.1} parent=1 // pred_check
      _
    $region15: #{bottleneck_block.1} parent=1 // pred_check_branch
      %17 = sbr.rel (0) target = $region17
    $region16: #{bottleneck_block.1} parent=1 // pred_region
      _
    $region17: #{bottleneck_block.1} parent=1 // pred_fallthru
      _
    %v18 = vld [vmem:[%s3] sm:$0xf]
    %v19 = vld [vmem:[%s3 + $0x4] sm:$0xf]
    %vm20 = vcmask 125952
    %v21 = vsel %vm20, %v18, 0.0
    %22 = vadd.xlane.f32.xlu0 %v21
    %v23 = vpop.xlane.xlu0 %22
    %v24 = vsel %vm20, %v19, 0.0
    %25 = vadd.xlane.f32.xlu0 %v24
    %v26 = vpop.xlane.xlu0 %25
    %v27 = vmul.f32 %v18, %v18
    %v28 = vmul.f32 %v19, %v19
    %v29 = vsel %vm20, %v27, 0.0
    %30 = vadd.xlane.f32.xlu0 %v29
    %v31 = vpop.xlane.xlu0 %30
    %v32 = vsel %vm20, %v28, 0.0
    %33 = vadd.xlane.f32.xlu0 %v32
    %v34 = vpop.xlane.xlu0 %33
    %vm35 = vcmask 1043456
    %v36 = vsel %vm35, %v23, 0.0
    %v37 = vsel %vm35, %v26, 0.0
    %v38 = vadd.f32 %v36, %v37
    %v39 = vmul.f32 %v38, 0.03125
    %v40 = vsel %vm35, %v31, 0.0
    %v41 = vsel %vm35, %v34, 0.0
    %v42 = vadd.f32 %v40, %v41
    %v43 = vmul.f32 %v42, 0.03125
    %v44 = vmul.f32 %v39, %v39
    %v45 = vsub.f32 %v43, %v44
    %v46 = vmax.f32 %v45, 0.0
    %v47 = vadd.f32 %v46, 1e-05
    %v48 = vrsqrt.pop %v47
    %v49 = vld [vmem:[%s0] sm:$0xf]
    %v50 = vmul.f32 %v49, %v48
    %v51 = vld [vmem:[%s1] sm:$0xf]
    %v52 = vmul.f32 %v39, %v50
    %v53 = vsub.f32 %v51, %v52
    %55 = vset.pattern.permute.xlu0 0
    %56 = vperm.xlu0 %55, %v50
    %v57 = vpop.permute.xlu0 %56
    %v59 = vmul.f32 %v18, %v57
    %v60 = vmul.f32 %v19, %v57
    %62 = vset.pattern.permute.xlu0 0
    %63 = vperm.xlu0 %62, %v53
    %v64 = vpop.permute.xlu0 %63
    %v66 = vadd.f32 %v59, %v64
    %v67 = vadd.f32 %v60, %v64
    %v68 = vmax.f32 %v66, 0.0
    %v69 = vmax.f32 %v67, 0.0
    %v70 = vld [vmem:[%s2] sm:$0xff]
    %72 = vset.pattern.permute.xlu0 0
    %73 = vperm.xlu0 %72, %v70
    %v74 = vpop.permute.xlu0 %73
    %v76 = vlaneseq
    %v77 = vshrl.u32 %v76, 7
    %v78 = vsub.s32 0, %v77
    %v79 = vrot.slane %v68, %v78
    %v80 = vmul.f32 %v74, %v79
    %81 = vset.pattern.permute.xlu0 1
    %82 = vperm.xlu0 %81, %v70
    %v83 = vpop.permute.xlu0 %82
    %v85 = vlaneseq
    %v86 = vshrl.u32 %v85, 7
    %v87 = vsub.s32 1, %v86
    %v88 = vrot.slane %v68, %v87
    %v89 = vmul.f32 %v83, %v88
    %v90 = vadd.f32 %v80, %v89
    %91 = vset.pattern.permute.xlu0 2
    %92 = vperm.xlu0 %91, %v70
    %v93 = vpop.permute.xlu0 %92
    %v95 = vlaneseq
    %v96 = vshrl.u32 %v95, 7
    %v97 = vsub.s32 2, %v96
    %v98 = vrot.slane %v68, %v97
    %v99 = vmul.f32 %v93, %v98
    %v100 = vadd.f32 %v90, %v99
    %101 = vset.pattern.permute.xlu0 3
    %102 = vperm.xlu0 %101, %v70
    %v103 = vpop.permute.xlu0 %102
    %v105 = vlaneseq
    %v106 = vshrl.u32 %v105, 7
    %v107 = vsub.s32 3, %v106
    %v108 = vrot.slane %v68, %v107
    %v109 = vmul.f32 %v103, %v108
    %v110 = vadd.f32 %v100, %v109
    %vm111 = vcmask 130048
    %112 = vst.msk [vmem:[#allocation2] sm:$0xff] %vm111, %v110
    %v113 = vld [vmem:[%s2] sm:$0xff]
    %115 = vset.pattern.permute.xlu0 0
    %116 = vperm.xlu0 %115, %v113
    %v117 = vpop.permute.xlu0 %116
    %v119 = vlaneseq
    %v120 = vshrl.u32 %v119, 7
    %v121 = vsub.s32 0, %v120
    %v122 = vrot.slane %v69, %v121
    %v123 = vmul.f32 %v117, %v122
    %124 = vset.pattern.permute.xlu0 1
    %125 = vperm.xlu0 %124, %v113
    %v126 = vpop.permute.xlu0 %125
    %v128 = vlaneseq
    %v129 = vshrl.u32 %v128, 7
    %v130 = vsub.s32 1, %v129
    %v131 = vrot.slane %v69, %v130
    %v132 = vmul.f32 %v126, %v131
    %v133 = vadd.f32 %v123, %v132
    %134 = vset.pattern.permute.xlu0 2
    %135 = vperm.xlu0 %134, %v113
    %v136 = vpop.permute.xlu0 %135
    %v138 = vlaneseq
    %v139 = vshrl.u32 %v138, 7
    %v140 = vsub.s32 2, %v139
    %v141 = vrot.slane %v69, %v140
    %v142 = vmul.f32 %v136, %v141
    %v143 = vadd.f32 %v133, %v142
    %144 = vset.pattern.permute.xlu0 3
    %145 = vperm.xlu0 %144, %v113
    %v146 = vpop.permute.xlu0 %145
    %v148 = vlaneseq
    %v149 = vshrl.u32 %v148, 7
    %v150 = vsub.s32 3, %v149
    %v151 = vrot.slane %v69, %v150
    %v152 = vmul.f32 %v146, %v151
    %v153 = vadd.f32 %v143, %v152
    %s154 = scalar_lea.vmem [#allocation2], 8
    %155 = vst.msk [vmem:[%s154] sm:$0xff] %vm111, %v153
    // Predicated region
    $region18: #{bottleneck_block.1} parent=1 // pred_check
      _
    $region19: #{bottleneck_block.1} parent=1 // pred_check_branch
      %157 = sbr.rel (0) target = $region21
    $region20: #{bottleneck_block.1} parent=1 // pred_region
      %s159 = ssub.s32 256, 256
      %160 = vsyncadd [#allocation3], %s159
      %s161 = sshll.u32 [#allocation2], 4
      %s162 = int_to_ptr.vmem [resolvable:$true] %s161
      %167 = dma.vmem_to_hbm [thread:$0]  %s162, 256, %s4, [#allocation3], 128, 128, 8
    $region21: #{bottleneck_block.1} parent=1 // pred_fallthru
      _
    // Predicated region
    $region22: #{bottleneck_block.1} parent=1 // pred_check
      _
    $region23: #{bottleneck_block.1} parent=1 // pred_check_branch
      %169 = sbr.rel (0) target = $region25
    $region24: #{bottleneck_block.1} parent=1 // pred_region
      %170 = dma.done [#allocation3], 256
    $region25: #{bottleneck_block.1} parent=1 // pred_fallthru
      _
    %171 = vsyncpa [#allocation3], 1

</llo_original>
